<compile_context>
chip_gen: v7x
topology: tpu7x:2x2x1
jax: 0.10.0
libtpu: 0.0.40
codegen_flags: <defaults>
</compile_context>

<pallas_src>
import jax
import jax.numpy as jnp
from jax.experimental import pallas as pl
from jax.experimental.pallas import tpu as pltpu

IN_FEATURES = 256
OUT_FEATURES = 2


def _round_up(n, m):
    return ((n + m - 1) // m) * m


def _head_kernel(x_ref, wd_ref, bd_ref, o_ref):
    # x_ref:  (TB, 256) activation tile (input dtype)
    # wd_ref: (256, 1)  w[1] - w[0] column (input dtype), VMEM-resident
    # bd_ref: (1,)      f32 SMEM scalar, b[1] - b[0]
    # o_ref:  (TB, 1)   per-row probability of class 1
    z = jnp.dot(
        x_ref[...], wd_ref[...],
        preferred_element_type=jnp.float32,
        precision=jax.lax.Precision.HIGHEST,
    )                                                   # (TB, 1), MXU
    z = z + bd_ref[0]

    # softmax(., dim=1)[:, 1] == sigmoid(z); numerically stable two-sided form
    # (only ever exponentiates non-positive values).
    e = jnp.exp(jnp.where(z >= 0, -z, z))
    p = jnp.where(z >= 0, 1.0, e) / (1.0 + e)
    o_ref[...] = p.astype(o_ref.dtype)


def _select_tile(batch, tb_req):
    """Sublane-aligned (multiple-of-8) batch tile.

    For moderate batches the tile is capped near ceil(B/2) so the grid has at
    least two tiles (lets v7x shard across its two TensorCores); for tiny
    batches a single full-array block is used (always a legal block shape).
    """
    tb_req = max(8, (int(tb_req) // 8) * 8)
    if batch > tb_req:
        return tb_req
    half = _round_up(pl.cdiv(batch, 2), 8)
    tb = min(tb_req, half)
    if tb >= batch:
        return batch
    return tb


def facial_recog_head(x, w, b, *, tb=8192):
    """x: (B, 256), w: (2, 256), b: (2,) -> (B,) probability of class 1."""
    B, F = x.shape
    assert F == IN_FEATURES

    # Fold the 2-class head into its logit-difference form once, in XLA
    # (weights are 2 KB, so this is free and removes any in-kernel transpose).
    w = w.astype(jnp.float32)
    b = b.astype(jnp.float32)
    w_diff = (w[1] - w[0]).reshape(F, 1).astype(x.dtype)     # (256, 1) column
    b_diff = (b[1] - b[0]).reshape(1)                        # (1,) f32 scalar

    tb_eff = _select_tile(B, tb)
    grid = (pl.cdiv(B, tb_eff),)

    in_item = jnp.dtype(x.dtype).itemsize
    cost = pl.CostEstimate(
        flops=2 * B * F,
        transcendentals=B,
        bytes_accessed=B * F * in_item + F * in_item + 4 + B * in_item,
    )

    out = pl.pallas_call(
        _head_kernel,
        out_shape=jax.ShapeDtypeStruct((B, 1), x.dtype),
        grid=grid,
        in_specs=[
            pl.BlockSpec((tb_eff, F), lambda i: (i, 0)),            # batch tile
            pl.BlockSpec((F, 1), lambda i: (0, 0)),                 # resident w_diff
            pl.BlockSpec(memory_space=pltpu.MemorySpace.SMEM),      # b_diff scalar
        ],
        out_specs=pl.BlockSpec((tb_eff, 1), lambda i: (i, 0)),
        compiler_params=pltpu.CompilerParams(
            dimension_semantics=("parallel",),
            vmem_limit_bytes=32 << 20,
        ),
        cost_estimate=cost,
    )(x, w_diff, b_diff)

    return out[:, 0]


def _reference(x, w, b):
    logits = x @ w.T + b
    m = jnp.max(logits, axis=1, keepdims=True)
    e = jnp.exp(logits - m)
    probs = e / jnp.sum(e, axis=1, keepdims=True)
    return probs[:, 1]


if __name__ == "__main__":
    key = jax.random.PRNGKey(0)
    kx, kw, kb, kx2 = jax.random.split(key, 4)

    # Deterministic Linear(256, 2) params (uniform in +/- 1/sqrt(fan_in),
    # matching nn.Linear's default init scale).
    bound = 1.0 / (IN_FEATURES ** 0.5)
    w = jax.random.uniform(kw, (OUT_FEATURES, IN_FEATURES),
                           minval=-bound, maxval=bound, dtype=jnp.float32)
    b = jax.random.uniform(kb, (OUT_FEATURES,),
                           minval=-bound, maxval=bound, dtype=jnp.float32)

    # Small primary check (B=8, single block).
    B = 8
    x = jax.random.normal(kx, (B, IN_FEATURES), dtype=jnp.float32)
    out = jax.block_until_ready(facial_recog_head(x, w, b))
    ref = _reference(x, w, b)
    assert out.shape == (B,)
    assert jnp.allclose(out, ref, atol=1e-5, rtol=1e-5)

    # Secondary check: multiple grid tiles + ragged (masked) tail, no padding.
    B2 = 300
    x2 = jax.random.normal(kx2, (B2, IN_FEATURES), dtype=jnp.float32)
    out2 = jax.block_until_ready(facial_recog_head(x2, w, b, tb=128))
    ref2 = _reference(x2, w, b)
    assert out2.shape == (B2,)
    assert jnp.allclose(out2, ref2, atol=1e-5, rtol=1e-5)

    print("KERNEL_OK")
</pallas_src>

<mosaic_0001>
module attributes {stable_mosaic.version = 11 : i64} {
  func.func @_head_kernel(%arg0: i32, %arg1: memref<8x256xf32, #tpu.memory_space<vmem>>, %arg2: memref<256x1xf32, #tpu.memory_space<vmem>>, %arg3: memref<1xf32, #tpu.memory_space<smem>>, %arg4: memref<8x1xf32, #tpu.memory_space<vmem>>) attributes {dimension_semantics = [#tpu.dimension_semantics<parallel>], iteration_bounds = array<i64: 1>, scalar_prefetch = 0 : i64, scratch_operands = 0 : i64, tpu.core_type = #tpu.core_type<tc>, window_params = [{transform_indices = @transform_0, window_bounds = array<i64: 8, 256>}, {pipeline_mode = #tpu.pipeline_mode<synchronous>, transform_indices = @transform_1, window_bounds = array<i64: 256, 1>}, {transform_indices = @transform_2, window_bounds = array<i64: 1>}, {transform_indices = @transform_3, window_bounds = array<i64: 8, 1>}]} {
    %c0 = arith.constant 0 : index
    %c0_0 = arith.constant 0 : index
    %0 = vector.load %arg1[%c0, %c0_0] : memref<8x256xf32, #tpu.memory_space<vmem>>, vector<8x256xf32>
    %c0_1 = arith.constant 0 : index
    %c0_2 = arith.constant 0 : index
    %1 = vector.load %arg2[%c0_1, %c0_2] : memref<256x1xf32, #tpu.memory_space<vmem>>, vector<256x1xf32>
    %cst = arith.constant dense<0.000000e+00> : vector<8x1xf32>
    %2 = tpu.matmul %0, %1, %cst {dimension_numbers = #tpu.dot_dimension_numbers<[1], [0], [0], [1], [0, 0, 1, 1], [], []>, precision = #tpu.contract_precision<fp32>} : vector<8x256xf32>, vector<256x1xf32>, vector<8x1xf32> -> vector<8x1xf32>
    %c0_3 = arith.constant 0 : index
    %3 = memref.load %arg3[%c0_3] : memref<1xf32, #tpu.memory_space<smem>>
    %4 = vector.broadcast %3 : f32 to vector<8x1xf32>
    %5 = arith.addf %2, %4 : vector<8x1xf32>
    %cst_4 = arith.constant 0.000000e+00 : f32
    %6 = vector.broadcast %cst_4 : f32 to vector<8x1xf32>
    %7 = arith.cmpf oge, %5, %6 : vector<8x1xf32>
    %cst_5 = arith.constant 0.000000e+00 : f32
    %8 = vector.broadcast %cst_5 : f32 to vector<8x1xf32>
    %9 = arith.subf %8, %5 : vector<8x1xf32>
    %10 = arith.select %7, %9, %5 : vector<8x1xi1>, vector<8x1xf32>
    %11 = math.exp %10 : vector<8x1xf32>
    %cst_6 = arith.constant 0.000000e+00 : f32
    %12 = vector.broadcast %cst_6 : f32 to vector<8x1xf32>
    %13 = arith.cmpf oge, %5, %12 : vector<8x1xf32>
    %cst_7 = arith.constant 1.000000e+00 : f32
    %14 = vector.broadcast %cst_7 : f32 to vector<8x1xf32>
    %15 = arith.select %13, %14, %11 : vector<8x1xi1>, vector<8x1xf32>
    %cst_8 = arith.constant 1.000000e+00 : f32
    %16 = vector.broadcast %cst_8 : f32 to vector<8x1xf32>
    %17 = arith.addf %16, %11 : vector<8x1xf32>
    %18 = arith.divf %15, %17 : vector<8x1xf32>
    %c0_9 = arith.constant 0 : index
    %c0_10 = arith.constant 0 : index
    %19 = vector.load %arg4[%c0_9, %c0_10] : memref<8x1xf32, #tpu.memory_space<vmem>>, vector<8x1xf32>
    tpu.vector_store %arg4[%c0_9, %c0_10], %18 {strides = array<i32>} : memref<8x1xf32, #tpu.memory_space<vmem>>, vector<8x1xf32>,
    return
  }
  func.func @transform_0(%arg0: i32) -> (i32, i32) {
    %c0_i32 = arith.constant 0 : i32
    %c0_i32_0 = arith.constant 0 : i32
    return %arg0, %c0_i32 : i32, i32
  }
  func.func @transform_1(%arg0: i32) -> (i32, i32) {
    %c0_i32 = arith.constant 0 : i32
    %c0_i32_0 = arith.constant 0 : i32
    %c0_i32_1 = arith.constant 0 : i32
    return %c0_i32, %c0_i32_0 : i32, i32
  }
  func.func @transform_2(%arg0: i32) -> i32 {
    %c0_i32 = arith.constant 0 : i32
    %c0_i32_0 = arith.constant 0 : i32
    return %c0_i32 : i32
  }
  func.func @transform_3(%arg0: i32) -> (i32, i32) {
    %c0_i32 = arith.constant 0 : i32
    %c0_i32_0 = arith.constant 0 : i32
    return %arg0, %c0_i32 : i32, i32
  }
}

</mosaic_0001>

<llo_original>
// kernel: tpu_custom_call.1
$region0: #{tpu_custom_call.1}
  #allocation0 [shape = 'u32[]', space=smem, size = 0x4, offset = 0x4, fixed_abs, tag = 'smem constant byte address 0x4 - core index']
  #allocation1 [shape = 'u32[144,128]{1,0:T(1,128)}', space=vmem, size = 0x12000, scoped, tag = 'internal scratch']
  #allocation2 [shape = 'f32[1]{0:T(128)S(6)}', space=smem, size = 0x200, scoped, tag = 'scoped memory for tpu_custom_call.1']
  %s0 = inlined_call_operand.vmem [shape: f32[8,256], index: 0, kind: input, shape index: {}]
  %s1 = inlined_call_operand.vmem [shape: f32[256,1], index: 1, kind: input, shape index: {}]
  %s2 = inlined_call_operand.<no memory space> [shape: f32[1], index: 2, kind: input, shape index: {}]
  %s3 = inlined_call_operand.vmem [shape: f32[8,1], index: 3, kind: output, shape index: {}]
  %s4 = sld [smem:[#allocation0]]
  $region22: #{tpu_custom_call.1} parent=0
    _
  %s6 = ssub.s32 1, %s4
  %s7 = scalar_select 0, %s6, %s4
  %8 = sst [smem:[#allocation2]] %s2
  // Predicated region
  $region2: #{tpu_custom_call.1} parent=0 // pred_check
    _
  $region3: #{tpu_custom_call.1} parent=0 // pred_check_branch
    %10 = sbr.rel (0) target = $region5
  $region4: #{tpu_custom_call.1} parent=0 // pred_region
    _
  $region5: #{tpu_custom_call.1} parent=0 // pred_fallthru
    _
  // Predicated region
  $region6: #{tpu_custom_call.1} parent=0 // pred_check
    _
  $region7: #{tpu_custom_call.1} parent=0 // pred_check_branch
    %12 = sbr.rel (0) target = $region9
  $region8: #{tpu_custom_call.1} parent=0 // pred_region
    _
  $region9: #{tpu_custom_call.1} parent=0 // pred_fallthru
    _
  // Predicated region
  $region10: #{tpu_custom_call.1} parent=0 // pred_check
    _
  $region11: #{tpu_custom_call.1} parent=0 // pred_check_branch
    %14 = sbr.rel (0) target = $region13
  $region12: #{tpu_custom_call.1} parent=0 // pred_region
    _
  $region13: #{tpu_custom_call.1} parent=0 // pred_fallthru
    _
  %v15 = vld [vmem:[%s0] sm:$0xff]
  %v16 = vld [vmem:[%s0 + $0x8] sm:$0xff]
  %v17 = vld [vmem:[%s1] sm:$0xff]
  %v18 = vld [vmem:[%s1 + $0x8] sm:$0xff]
  %v19 = vld [vmem:[%s1 + $0x10] sm:$0xff]
  %v20 = vld [vmem:[%s1 + $0x18] sm:$0xff]
  %v21 = vld [vmem:[%s1 + $0x20] sm:$0xff]
  %v22 = vld [vmem:[%s1 + $0x28] sm:$0xff]
  %v23 = vld [vmem:[%s1 + $0x30] sm:$0xff]
  %v24 = vld [vmem:[%s1 + $0x38] sm:$0xff]
  %v25 = vld [vmem:[%s1 + $0x40] sm:$0xff]
  %v26 = vld [vmem:[%s1 + $0x48] sm:$0xff]
  %v27 = vld [vmem:[%s1 + $0x50] sm:$0xff]
  %v28 = vld [vmem:[%s1 + $0x58] sm:$0xff]
  %v29 = vld [vmem:[%s1 + $0x60] sm:$0xff]
  %v30 = vld [vmem:[%s1 + $0x68] sm:$0xff]
  %v31 = vld [vmem:[%s1 + $0x70] sm:$0xff]
  %v32 = vld [vmem:[%s1 + $0x78] sm:$0xff]
  %v33 = vld [vmem:[%s1 + $0x80] sm:$0xff]
  %v34 = vld [vmem:[%s1 + $0x88] sm:$0xff]
  %v35 = vld [vmem:[%s1 + $0x90] sm:$0xff]
  %v36 = vld [vmem:[%s1 + $0x98] sm:$0xff]
  %v37 = vld [vmem:[%s1 + $0xa0] sm:$0xff]
  %v38 = vld [vmem:[%s1 + $0xa8] sm:$0xff]
  %v39 = vld [vmem:[%s1 + $0xb0] sm:$0xff]
  %v40 = vld [vmem:[%s1 + $0xb8] sm:$0xff]
  %v41 = vld [vmem:[%s1 + $0xc0] sm:$0xff]
  %v42 = vld [vmem:[%s1 + $0xc8] sm:$0xff]
  %v43 = vld [vmem:[%s1 + $0xd0] sm:$0xff]
  %v44 = vld [vmem:[%s1 + $0xd8] sm:$0xff]
  %v45 = vld [vmem:[%s1 + $0xe0] sm:$0xff]
  %v46 = vld [vmem:[%s1 + $0xe8] sm:$0xff]
  %v47 = vld [vmem:[%s1 + $0xf0] sm:$0xff]
  %v48 = vld [vmem:[%s1 + $0xf8] sm:$0xff]
  %s49 = sld [smem:[#allocation2]]
  %v50 = vstv %s49
  %51 = vmatprep.subr.mxu0 0.0
  %v52 = vand.u32 %v17, 4294901760
  %53 = vmatpush1.msra.mxu0 %v52
  %54 = vmatprep.subr.mxu0 0.0
  %v55 = vand.u32 %v18, 4294901760
  %56 = vmatpush1.msra.mxu0 %v55
  %57 = vmatprep.subr.mxu0 0.0
  %v58 = vand.u32 %v19, 4294901760
  %59 = vmatpush1.msra.mxu0 %v58
  %60 = vmatprep.subr.mxu0 0.0
  %v61 = vand.u32 %v20, 4294901760
  %62 = vmatpush1.msra.mxu0 %v61
  %63 = vmatprep.subr.mxu0 0.0
  %v64 = vand.u32 %v21, 4294901760
  %65 = vmatpush1.msra.mxu0 %v64
  %66 = vmatprep.subr.mxu0 0.0
  %v67 = vand.u32 %v22, 4294901760
  %68 = vmatpush1.msra.mxu0 %v67
  %69 = vmatprep.subr.mxu0 0.0
  %v70 = vand.u32 %v23, 4294901760
  %71 = vmatpush1.msra.mxu0 %v70
  %72 = vmatprep.subr.mxu0 0.0
  %v73 = vand.u32 %v24, 4294901760
  %74 = vmatpush1.msra.mxu0 %v73
  %75 = vmatprep.subr.mxu0 0.0
  %v76 = vand.u32 %v25, 4294901760
  %77 = vmatpush1.msra.mxu0 %v76
  %78 = vmatprep.subr.mxu0 0.0
  %v79 = vand.u32 %v26, 4294901760
  %80 = vmatpush1.msra.mxu0 %v79
  %81 = vmatprep.subr.mxu0 0.0
  %v82 = vand.u32 %v27, 4294901760
  %83 = vmatpush1.msra.mxu0 %v82
  %84 = vmatprep.subr.mxu0 0.0
  %v85 = vand.u32 %v28, 4294901760
  %86 = vmatpush1.msra.mxu0 %v85
  %87 = vmatprep.subr.mxu0 0.0
  %v88 = vand.u32 %v29, 4294901760
  %89 = vmatpush1.msra.mxu0 %v88
  %90 = vmatprep.subr.mxu0 0.0
  %v91 = vand.u32 %v30, 4294901760
  %92 = vmatpush1.msra.mxu0 %v91
  %93 = vmatprep.subr.mxu0 0.0
  %v94 = vand.u32 %v31, 4294901760
  %95 = vmatpush1.msra.mxu0 %v94
  %96 = vmatprep.subr.mxu0 0.0
  %v97 = vand.u32 %v32, 4294901760
  %98 = vmatpush1.msra.mxu0 %v97
  %99 = vmatprep.subr.mxu0 0.0
  %v100 = vand.u32 %v33, 4294901760
  %101 = vmatpush1.msra.mxu0 %v100
  %102 = vmatprep.subr.mxu0 0.0
  %v103 = vand.u32 %v34, 4294901760
  %104 = vmatpush1.msra.mxu0 %v103
  %105 = vmatprep.subr.mxu0 0.0
  %v106 = vand.u32 %v35, 4294901760
  %107 = vmatpush1.msra.mxu0 %v106
  %108 = vmatprep.subr.mxu0 0.0
  %v109 = vand.u32 %v36, 4294901760
  %110 = vmatpush1.msra.mxu0 %v109
  %111 = vmatprep.subr.mxu0 0.0
  %v112 = vand.u32 %v37, 4294901760
  %113 = vmatpush1.msra.mxu0 %v112
  %114 = vmatprep.subr.mxu0 0.0
  %v115 = vand.u32 %v38, 4294901760
  %116 = vmatpush1.msra.mxu0 %v115
  %117 = vmatprep.subr.mxu0 0.0
  %v118 = vand.u32 %v39, 4294901760
  %119 = vmatpush1.msra.mxu0 %v118
  %120 = vmatprep.subr.mxu0 0.0
  %v121 = vand.u32 %v40, 4294901760
  %122 = vmatpush1.msra.mxu0 %v121
  %123 = vmatprep.subr.mxu0 0.0
  %v124 = vand.u32 %v41, 4294901760
  %125 = vmatpush1.msra.mxu0 %v124
  %126 = vmatprep.subr.mxu0 0.0
  %v127 = vand.u32 %v42, 4294901760
  %128 = vmatpush1.msra.mxu0 %v127
  %129 = vmatprep.subr.mxu0 0.0
  %v130 = vand.u32 %v43, 4294901760
  %131 = vmatpush1.msra.mxu0 %v130
  %132 = vmatprep.subr.mxu0 0.0
  %v133 = vand.u32 %v44, 4294901760
  %134 = vmatpush1.msra.mxu0 %v133
  %135 = vmatprep.subr.mxu0 0.0
  %v136 = vand.u32 %v45, 4294901760
  %137 = vmatpush1.msra.mxu0 %v136
  %138 = vmatprep.subr.mxu0 0.0
  %v139 = vand.u32 %v46, 4294901760
  %140 = vmatpush1.msra.mxu0 %v139
  %141 = vmatprep.subr.mxu0 0.0
  %v142 = vand.u32 %v47, 4294901760
  %143 = vmatpush1.msra.mxu0 %v142
  %144 = vmatprep.subr.mxu0 0.0
  %v145 = vand.u32 %v48, 4294901760
  %146 = vmatpush1.msra.mxu0 %v145
  %v147 = vand.u32 %v16, 4294901760
  %v148 = vsub.f32 %v16, %v147
  %v149 = vand.u32 %v148, 4294901760
  %v150 = vsub.f32 %v148, %v149
  %v151 = vand.u32 %v150, 4294901760
  %152 = vmatprep.mubr.f32.mxu0 %v151
  %v153 = vand.u32 %v15, 4294901760
  %v154 = vsub.f32 %v15, %v153
  %v155 = vand.u32 %v154, 4294901760
  %v156 = vsub.f32 %v154, %v155
  %v157 = vand.u32 %v156, 4294901760
  %158 = vmatmul.mubr.f32.gmra.mrb[0].mxu0 %v157
  %v159 = vpop.f32.mrb[0].mxu0
  %v160 = vadd.f32 %v50, %v159
  %v161 = vpop.f32.mrb[0].mxu0
  %162 = vdwg.mxu0
  %163 = vmatprep.subr.mxu0 0.0
  %v164 = vand.u32 %v17, 4294901760
  %v165 = vsub.f32 %v17, %v164
  %v166 = vand.u32 %v165, 4294901760
  %v167 = vsub.f32 %v165, %v166
  %v168 = vand.u32 %v167, 4294901760
  %169 = vmatpush1.msra.mxu0 %v168
  %170 = vmatprep.subr.mxu0 0.0
  %v171 = vand.u32 %v18, 4294901760
  %v172 = vsub.f32 %v18, %v171
  %v173 = vand.u32 %v172, 4294901760
  %v174 = vsub.f32 %v172, %v173
  %v175 = vand.u32 %v174, 4294901760
  %176 = vmatpush1.msra.mxu0 %v175
  %177 = vmatprep.subr.mxu0 0.0
  %v178 = vand.u32 %v19, 4294901760
  %v179 = vsub.f32 %v19, %v178
  %v180 = vand.u32 %v179, 4294901760
  %v181 = vsub.f32 %v179, %v180
  %v182 = vand.u32 %v181, 4294901760
  %183 = vmatpush1.msra.mxu0 %v182
  %184 = vmatprep.subr.mxu0 0.0
  %v185 = vand.u32 %v20, 4294901760
  %v186 = vsub.f32 %v20, %v185
  %v187 = vand.u32 %v186, 4294901760
  %v188 = vsub.f32 %v186, %v187
  %v189 = vand.u32 %v188, 4294901760
  %190 = vmatpush1.msra.mxu0 %v189
  %191 = vmatprep.subr.mxu0 0.0
  %v192 = vand.u32 %v21, 4294901760
  %v193 = vsub.f32 %v21, %v192
  %v194 = vand.u32 %v193, 4294901760
  %v195 = vsub.f32 %v193, %v194
  %v196 = vand.u32 %v195, 4294901760
  %197 = vmatpush1.msra.mxu0 %v196
  %198 = vmatprep.subr.mxu0 0.0
  %v199 = vand.u32 %v22, 4294901760
  %v200 = vsub.f32 %v22, %v199
  %v201 = vand.u32 %v200, 4294901760
  %v202 = vsub.f32 %v200, %v201
  %v203 = vand.u32 %v202, 4294901760
  %204 = vmatpush1.msra.mxu0 %v203
  %205 = vmatprep.subr.mxu0 0.0
  %v206 = vand.u32 %v23, 4294901760
  %v207 = vsub.f32 %v23, %v206
  %v208 = vand.u32 %v207, 4294901760
  %v209 = vsub.f32 %v207, %v208
  %v210 = vand.u32 %v209, 4294901760
  %211 = vmatpush1.msra.mxu0 %v210
  %212 = vmatprep.subr.mxu0 0.0
  %v213 = vand.u32 %v24, 4294901760
  %v214 = vsub.f32 %v24, %v213
  %v215 = vand.u32 %v214, 4294901760
  %v216 = vsub.f32 %v214, %v215
  %v217 = vand.u32 %v216, 4294901760
  %218 = vmatpush1.msra.mxu0 %v217
  %219 = vmatprep.subr.mxu0 0.0
  %v220 = vand.u32 %v25, 4294901760
  %v221 = vsub.f32 %v25, %v220
  %v222 = vand.u32 %v221, 4294901760
  %v223 = vsub.f32 %v221, %v222
  %v224 = vand.u32 %v223, 4294901760
  %225 = vmatpush1.msra.mxu0 %v224
  %226 = vmatprep.subr.mxu0 0.0
  %v227 = vand.u32 %v26, 4294901760
  %v228 = vsub.f32 %v26, %v227
  %v229 = vand.u32 %v228, 4294901760
  %v230 = vsub.f32 %v228, %v229
  %v231 = vand.u32 %v230, 4294901760
  %232 = vmatpush1.msra.mxu0 %v231
  %233 = vmatprep.subr.mxu0 0.0
  %v234 = vand.u32 %v27, 4294901760
  %v235 = vsub.f32 %v27, %v234
  %v236 = vand.u32 %v235, 4294901760
  %v237 = vsub.f32 %v235, %v236
  %v238 = vand.u32 %v237, 4294901760
  %239 = vmatpush1.msra.mxu0 %v238
  %240 = vmatprep.subr.mxu0 0.0
  %v241 = vand.u32 %v28, 4294901760
  %v242 = vsub.f32 %v28, %v241
  %v243 = vand.u32 %v242, 4294901760
  %v244 = vsub.f32 %v242, %v243
  %v245 = vand.u32 %v244, 4294901760
  %246 = vmatpush1.msra.mxu0 %v245
  %247 = vmatprep.subr.mxu0 0.0
  %v248 = vand.u32 %v29, 4294901760
  %v249 = vsub.f32 %v29, %v248
  %v250 = vand.u32 %v249, 4294901760
  %v251 = vsub.f32 %v249, %v250
  %v252 = vand.u32 %v251, 4294901760
  %253 = vmatpush1.msra.mxu0 %v252
  %254 = vmatprep.subr.mxu0 0.0
  %v255 = vand.u32 %v30, 4294901760
  %v256 = vsub.f32 %v30, %v255
  %v257 = vand.u32 %v256, 4294901760
  %v258 = vsub.f32 %v256, %v257
  %v259 = vand.u32 %v258, 4294901760
  %260 = vmatpush1.msra.mxu0 %v259
  %261 = vmatprep.subr.mxu0 0.0
  %v262 = vand.u32 %v31, 4294901760
  %v263 = vsub.f32 %v31, %v262
  %v264 = vand.u32 %v263, 4294901760
  %v265 = vsub.f32 %v263, %v264
  %v266 = vand.u32 %v265, 4294901760
  %267 = vmatpush1.msra.mxu0 %v266
  %268 = vmatprep.subr.mxu0 0.0
  %v269 = vand.u32 %v32, 4294901760
  %v270 = vsub.f32 %v32, %v269
  %v271 = vand.u32 %v270, 4294901760
  %v272 = vsub.f32 %v270, %v271
  %v273 = vand.u32 %v272, 4294901760
  %274 = vmatpush1.msra.mxu0 %v273
  %275 = vmatprep.subr.mxu0 0.0
  %v276 = vand.u32 %v33, 4294901760
  %v277 = vsub.f32 %v33, %v276
  %v278 = vand.u32 %v277, 4294901760
  %v279 = vsub.f32 %v277, %v278
  %v280 = vand.u32 %v279, 4294901760
  %281 = vmatpush1.msra.mxu0 %v280
  %282 = vmatprep.subr.mxu0 0.0
  %v283 = vand.u32 %v34, 4294901760
  %v284 = vsub.f32 %v34, %v283
  %v285 = vand.u32 %v284, 4294901760
  %v286 = vsub.f32 %v284, %v285
  %v287 = vand.u32 %v286, 4294901760
  %288 = vmatpush1.msra.mxu0 %v287
  %289 = vmatprep.subr.mxu0 0.0
  %v290 = vand.u32 %v35, 4294901760
  %v291 = vsub.f32 %v35, %v290
  %v292 = vand.u32 %v291, 4294901760
  %v293 = vsub.f32 %v291, %v292
  %v294 = vand.u32 %v293, 4294901760
  %295 = vmatpush1.msra.mxu0 %v294
  %296 = vmatprep.subr.mxu0 0.0
  %v297 = vand.u32 %v36, 4294901760
  %v298 = vsub.f32 %v36, %v297
  %v299 = vand.u32 %v298, 4294901760
  %v300 = vsub.f32 %v298, %v299
  %v301 = vand.u32 %v300, 4294901760
  %302 = vmatpush1.msra.mxu0 %v301
  %303 = vmatprep.subr.mxu0 0.0
  %v304 = vand.u32 %v37, 4294901760
  %v305 = vsub.f32 %v37, %v304
  %v306 = vand.u32 %v305, 4294901760
  %v307 = vsub.f32 %v305, %v306
  %v308 = vand.u32 %v307, 4294901760
  %309 = vmatpush1.msra.mxu0 %v308
  %310 = vmatprep.subr.mxu0 0.0
  %v311 = vand.u32 %v38, 4294901760
  %v312 = vsub.f32 %v38, %v311
  %v313 = vand.u32 %v312, 4294901760
  %v314 = vsub.f32 %v312, %v313
  %v315 = vand.u32 %v314, 4294901760
  %316 = vmatpush1.msra.mxu0 %v315
  %317 = vmatprep.subr.mxu0 0.0
  %v318 = vand.u32 %v39, 4294901760
  %v319 = vsub.f32 %v39, %v318
  %v320 = vand.u32 %v319, 4294901760
  %v321 = vsub.f32 %v319, %v320
  %v322 = vand.u32 %v321, 4294901760
  %323 = vmatpush1.msra.mxu0 %v322
  %324 = vmatprep.subr.mxu0 0.0
  %v325 = vand.u32 %v40, 4294901760
  %v326 = vsub.f32 %v40, %v325
  %v327 = vand.u32 %v326, 4294901760
  %v328 = vsub.f32 %v326, %v327
  %v329 = vand.u32 %v328, 4294901760
  %330 = vmatpush1.msra.mxu0 %v329
  %331 = vmatprep.subr.mxu0 0.0
  %v332 = vand.u32 %v41, 4294901760
  %v333 = vsub.f32 %v41, %v332
  %v334 = vand.u32 %v333, 4294901760
  %v335 = vsub.f32 %v333, %v334
  %v336 = vand.u32 %v335, 4294901760
  %337 = vmatpush1.msra.mxu0 %v336
  %338 = vmatprep.subr.mxu0 0.0
  %v339 = vand.u32 %v42, 4294901760
  %v340 = vsub.f32 %v42, %v339
  %v341 = vand.u32 %v340, 4294901760
  %v342 = vsub.f32 %v340, %v341
  %v343 = vand.u32 %v342, 4294901760
  %344 = vmatpush1.msra.mxu0 %v343
  %345 = vmatprep.subr.mxu0 0.0
  %v346 = vand.u32 %v43, 4294901760
  %v347 = vsub.f32 %v43, %v346
  %v348 = vand.u32 %v347, 4294901760
  %v349 = vsub.f32 %v347, %v348
  %v350 = vand.u32 %v349, 4294901760
  %351 = vmatpush1.msra.mxu0 %v350
  %352 = vmatprep.subr.mxu0 0.0
  %v353 = vand.u32 %v44, 4294901760
  %v354 = vsub.f32 %v44, %v353
  %v355 = vand.u32 %v354, 4294901760
  %v356 = vsub.f32 %v354, %v355
  %v357 = vand.u32 %v356, 4294901760
  %358 = vmatpush1.msra.mxu0 %v357
  %359 = vmatprep.subr.mxu0 0.0
  %v360 = vand.u32 %v45, 4294901760
  %v361 = vsub.f32 %v45, %v360
  %v362 = vand.u32 %v361, 4294901760
  %v363 = vsub.f32 %v361, %v362
  %v364 = vand.u32 %v363, 4294901760
  %365 = vmatpush1.msra.mxu0 %v364
  %366 = vmatprep.subr.mxu0 0.0
  %v367 = vand.u32 %v46, 4294901760
  %v368 = vsub.f32 %v46, %v367
  %v369 = vand.u32 %v368, 4294901760
  %v370 = vsub.f32 %v368, %v369
  %v371 = vand.u32 %v370, 4294901760
  %372 = vmatpush1.msra.mxu0 %v371
  %373 = vmatprep.subr.mxu0 0.0
  %v374 = vand.u32 %v47, 4294901760
  %v375 = vsub.f32 %v47, %v374
  %v376 = vand.u32 %v375, 4294901760
  %v377 = vsub.f32 %v375, %v376
  %v378 = vand.u32 %v377, 4294901760
  %379 = vmatpush1.msra.mxu0 %v378
  %380 = vmatprep.subr.mxu0 0.0
  %v381 = vand.u32 %v48, 4294901760
  %v382 = vsub.f32 %v48, %v381
  %v383 = vand.u32 %v382, 4294901760
  %v384 = vsub.f32 %v382, %v383
  %v385 = vand.u32 %v384, 4294901760
  %386 = vmatpush1.msra.mxu0 %v385
  %v387 = vand.u32 %v16, 4294901760
  %388 = vmatprep.mubr.f32.mxu0 %v387
  %v389 = vand.u32 %v15, 4294901760
  %390 = vmatmul.mubr.f32.gmra.mrb[0].mxu0 %v389
  %v391 = vpop.f32.mrb[0].mxu0
  %v392 = vadd.f32 %v160, %v391
  %v393 = vpop.f32.mrb[0].mxu0
  %394 = vdwg.mxu0
  %395 = vmatprep.subr.mxu0 0.0
  %v396 = vand.u32 %v17, 4294901760
  %v397 = vsub.f32 %v17, %v396
  %398 = vmatpush1.msra.mxu0 %v397
  %399 = vmatprep.subr.mxu0 0.0
  %v400 = vand.u32 %v18, 4294901760
  %v401 = vsub.f32 %v18, %v400
  %402 = vmatpush1.msra.mxu0 %v401
  %403 = vmatprep.subr.mxu0 0.0
  %v404 = vand.u32 %v19, 4294901760
  %v405 = vsub.f32 %v19, %v404
  %406 = vmatpush1.msra.mxu0 %v405
  %407 = vmatprep.subr.mxu0 0.0
  %v408 = vand.u32 %v20, 4294901760
  %v409 = vsub.f32 %v20, %v408
  %410 = vmatpush1.msra.mxu0 %v409
  %411 = vmatprep.subr.mxu0 0.0
  %v412 = vand.u32 %v21, 4294901760
  %v413 = vsub.f32 %v21, %v412
  %414 = vmatpush1.msra.mxu0 %v413
  %415 = vmatprep.subr.mxu0 0.0
  %v416 = vand.u32 %v22, 4294901760
  %v417 = vsub.f32 %v22, %v416
  %418 = vmatpush1.msra.mxu0 %v417
  %419 = vmatprep.subr.mxu0 0.0
  %v420 = vand.u32 %v23, 4294901760
  %v421 = vsub.f32 %v23, %v420
  %422 = vmatpush1.msra.mxu0 %v421
  %423 = vmatprep.subr.mxu0 0.0
  %v424 = vand.u32 %v24, 4294901760
  %v425 = vsub.f32 %v24, %v424
  %426 = vmatpush1.msra.mxu0 %v425
  %427 = vmatprep.subr.mxu0 0.0
  %v428 = vand.u32 %v25, 4294901760
  %v429 = vsub.f32 %v25, %v428
  %430 = vmatpush1.msra.mxu0 %v429
  %431 = vmatprep.subr.mxu0 0.0
  %v432 = vand.u32 %v26, 4294901760
  %v433 = vsub.f32 %v26, %v432
  %434 = vmatpush1.msra.mxu0 %v433
  %435 = vmatprep.subr.mxu0 0.0
  %v436 = vand.u32 %v27, 4294901760
  %v437 = vsub.f32 %v27, %v436
  %438 = vmatpush1.msra.mxu0 %v437
  %439 = vmatprep.subr.mxu0 0.0
  %v440 = vand.u32 %v28, 4294901760
  %v441 = vsub.f32 %v28, %v440
  %442 = vmatpush1.msra.mxu0 %v441
  %443 = vmatprep.subr.mxu0 0.0
  %v444 = vand.u32 %v29, 4294901760
  %v445 = vsub.f32 %v29, %v444
  %446 = vmatpush1.msra.mxu0 %v445
  %447 = vmatprep.subr.mxu0 0.0
  %v448 = vand.u32 %v30, 4294901760
  %v449 = vsub.f32 %v30, %v448
  %450 = vmatpush1.msra.mxu0 %v449
  %451 = vmatprep.subr.mxu0 0.0
  %v452 = vand.u32 %v31, 4294901760
  %v453 = vsub.f32 %v31, %v452
  %454 = vmatpush1.msra.mxu0 %v453
  %455 = vmatprep.subr.mxu0 0.0
  %v456 = vand.u32 %v32, 4294901760
  %v457 = vsub.f32 %v32, %v456
  %458 = vmatpush1.msra.mxu0 %v457
  %459 = vmatprep.subr.mxu0 0.0
  %v460 = vand.u32 %v33, 4294901760
  %v461 = vsub.f32 %v33, %v460
  %462 = vmatpush1.msra.mxu0 %v461
  %463 = vmatprep.subr.mxu0 0.0
  %v464 = vand.u32 %v34, 4294901760
  %v465 = vsub.f32 %v34, %v464
  %466 = vmatpush1.msra.mxu0 %v465
  %467 = vmatprep.subr.mxu0 0.0
  %v468 = vand.u32 %v35, 4294901760
  %v469 = vsub.f32 %v35, %v468
  %470 = vmatpush1.msra.mxu0 %v469
  %471 = vmatprep.subr.mxu0 0.0
  %v472 = vand.u32 %v36, 4294901760
  %v473 = vsub.f32 %v36, %v472
  %474 = vmatpush1.msra.mxu0 %v473
  %475 = vmatprep.subr.mxu0 0.0
  %v476 = vand.u32 %v37, 4294901760
  %v477 = vsub.f32 %v37, %v476
  %478 = vmatpush1.msra.mxu0 %v477
  %479 = vmatprep.subr.mxu0 0.0
  %v480 = vand.u32 %v38, 4294901760
  %v481 = vsub.f32 %v38, %v480
  %482 = vmatpush1.msra.mxu0 %v481
  %483 = vmatprep.subr.mxu0 0.0
  %v484 = vand.u32 %v39, 4294901760
  %v485 = vsub.f32 %v39, %v484
  %486 = vmatpush1.msra.mxu0 %v485
  %487 = vmatprep.subr.mxu0 0.0
  %v488 = vand.u32 %v40, 4294901760
  %v489 = vsub.f32 %v40, %v488
  %490 = vmatpush1.msra.mxu0 %v489
  %491 = vmatprep.subr.mxu0 0.0
  %v492 = vand.u32 %v41, 4294901760
  %v493 = vsub.f32 %v41, %v492
  %494 = vmatpush1.msra.mxu0 %v493
  %495 = vmatprep.subr.mxu0 0.0
  %v496 = vand.u32 %v42, 4294901760
  %v497 = vsub.f32 %v42, %v496
  %498 = vmatpush1.msra.mxu0 %v497
  %499 = vmatprep.subr.mxu0 0.0
  %v500 = vand.u32 %v43, 4294901760
  %v501 = vsub.f32 %v43, %v500
  %502 = vmatpush1.msra.mxu0 %v501
  %503 = vmatprep.subr.mxu0 0.0
  %v504 = vand.u32 %v44, 4294901760
  %v505 = vsub.f32 %v44, %v504
  %506 = vmatpush1.msra.mxu0 %v505
  %507 = vmatprep.subr.mxu0 0.0
  %v508 = vand.u32 %v45, 4294901760
  %v509 = vsub.f32 %v45, %v508
  %510 = vmatpush1.msra.mxu0 %v509
  %511 = vmatprep.subr.mxu0 0.0
  %v512 = vand.u32 %v46, 4294901760
  %v513 = vsub.f32 %v46, %v512
  %514 = vmatpush1.msra.mxu0 %v513
  %515 = vmatprep.subr.mxu0 0.0
  %v516 = vand.u32 %v47, 4294901760
  %v517 = vsub.f32 %v47, %v516
  %518 = vmatpush1.msra.mxu0 %v517
  %519 = vmatprep.subr.mxu0 0.0
  %v520 = vand.u32 %v48, 4294901760
  %v521 = vsub.f32 %v48, %v520
  %522 = vmatpush1.msra.mxu0 %v521
  %v523 = vand.u32 %v16, 4294901760
  %v524 = vsub.f32 %v16, %v523
  %525 = vmatprep.mubr.f32.mxu0 %v524
  %v526 = vand.u32 %v15, 4294901760
  %v527 = vsub.f32 %v15, %v526
  %528 = vmatmul.mubr.f32.gmra.mrb[0].mxu0 %v527
  %v529 = vpop.f32.mrb[0].mxu0
  %v530 = vadd.f32 %v392, %v529
  %v531 = vpop.f32.mrb[0].mxu0
  %532 = vdwg.mxu0
  %533 = vmatprep.subr.mxu0 0.0
  %v534 = vand.u32 %v17, 4294901760
  %535 = vmatpush1.msra.mxu0 %v534
  %536 = vmatprep.subr.mxu0 0.0
  %v537 = vand.u32 %v18, 4294901760
  %538 = vmatpush1.msra.mxu0 %v537
  %539 = vmatprep.subr.mxu0 0.0
  %v540 = vand.u32 %v19, 4294901760
  %541 = vmatpush1.msra.mxu0 %v540
  %542 = vmatprep.subr.mxu0 0.0
  %v543 = vand.u32 %v20, 4294901760
  %544 = vmatpush1.msra.mxu0 %v543
  %545 = vmatprep.subr.mxu0 0.0
  %v546 = vand.u32 %v21, 4294901760
  %547 = vmatpush1.msra.mxu0 %v546
  %548 = vmatprep.subr.mxu0 0.0
  %v549 = vand.u32 %v22, 4294901760
  %550 = vmatpush1.msra.mxu0 %v549
  %551 = vmatprep.subr.mxu0 0.0
  %v552 = vand.u32 %v23, 4294901760
  %553 = vmatpush1.msra.mxu0 %v552
  %554 = vmatprep.subr.mxu0 0.0
  %v555 = vand.u32 %v24, 4294901760
  %556 = vmatpush1.msra.mxu0 %v555
  %557 = vmatprep.subr.mxu0 0.0
  %v558 = vand.u32 %v25, 4294901760
  %559 = vmatpush1.msra.mxu0 %v558
  %560 = vmatprep.subr.mxu0 0.0
  %v561 = vand.u32 %v26, 4294901760
  %562 = vmatpush1.msra.mxu0 %v561
  %563 = vmatprep.subr.mxu0 0.0
  %v564 = vand.u32 %v27, 4294901760
  %565 = vmatpush1.msra.mxu0 %v564
  %566 = vmatprep.subr.mxu0 0.0
  %v567 = vand.u32 %v28, 4294901760
  %568 = vmatpush1.msra.mxu0 %v567
  %569 = vmatprep.subr.mxu0 0.0
  %v570 = vand.u32 %v29, 4294901760
  %571 = vmatpush1.msra.mxu0 %v570
  %572 = vmatprep.subr.mxu0 0.0
  %v573 = vand.u32 %v30, 4294901760
  %574 = vmatpush1.msra.mxu0 %v573
  %575 = vmatprep.subr.mxu0 0.0
  %v576 = vand.u32 %v31, 4294901760
  %577 = vmatpush1.msra.mxu0 %v576
  %578 = vmatprep.subr.mxu0 0.0
  %v579 = vand.u32 %v32, 4294901760
  %580 = vmatpush1.msra.mxu0 %v579
  %581 = vmatprep.subr.mxu0 0.0
  %v582 = vand.u32 %v33, 4294901760
  %583 = vmatpush1.msra.mxu0 %v582
  %584 = vmatprep.subr.mxu0 0.0
  %v585 = vand.u32 %v34, 4294901760
  %586 = vmatpush1.msra.mxu0 %v585
  %587 = vmatprep.subr.mxu0 0.0
  %v588 = vand.u32 %v35, 4294901760
  %589 = vmatpush1.msra.mxu0 %v588
  %590 = vmatprep.subr.mxu0 0.0
  %v591 = vand.u32 %v36, 4294901760
  %592 = vmatpush1.msra.mxu0 %v591
  %593 = vmatprep.subr.mxu0 0.0
  %v594 = vand.u32 %v37, 4294901760
  %595 = vmatpush1.msra.mxu0 %v594
  %596 = vmatprep.subr.mxu0 0.0
  %v597 = vand.u32 %v38, 4294901760
  %598 = vmatpush1.msra.mxu0 %v597
  %599 = vmatprep.subr.mxu0 0.0
  %v600 = vand.u32 %v39, 4294901760
  %601 = vmatpush1.msra.mxu0 %v600
  %602 = vmatprep.subr.mxu0 0.0
  %v603 = vand.u32 %v40, 4294901760
  %604 = vmatpush1.msra.mxu0 %v603
  %605 = vmatprep.subr.mxu0 0.0
  %v606 = vand.u32 %v41, 4294901760
  %607 = vmatpush1.msra.mxu0 %v606
  %608 = vmatprep.subr.mxu0 0.0
  %v609 = vand.u32 %v42, 4294901760
  %610 = vmatpush1.msra.mxu0 %v609
  %611 = vmatprep.subr.mxu0 0.0
  %v612 = vand.u32 %v43, 4294901760
  %613 = vmatpush1.msra.mxu0 %v612
  %614 = vmatprep.subr.mxu0 0.0
  %v615 = vand.u32 %v44, 4294901760
  %616 = vmatpush1.msra.mxu0 %v615
  %617 = vmatprep.subr.mxu0 0.0
  %v618 = vand.u32 %v45, 4294901760
  %619 = vmatpush1.msra.mxu0 %v618
  %620 = vmatprep.subr.mxu0 0.0
  %v621 = vand.u32 %v46, 4294901760
  %622 = vmatpush1.msra.mxu0 %v621
  %623 = vmatprep.subr.mxu0 0.0
  %v624 = vand.u32 %v47, 4294901760
  %625 = vmatpush1.msra.mxu0 %v624
  %626 = vmatprep.subr.mxu0 0.0
  %v627 = vand.u32 %v48, 4294901760
  %628 = vmatpush1.msra.mxu0 %v627
  %v629 = vand.u32 %v16, 4294901760
  %v630 = vsub.f32 %v16, %v629
  %v631 = vand.u32 %v630, 4294901760
  %632 = vmatprep.mubr.f32.mxu0 %v631
  %v633 = vand.u32 %v15, 4294901760
  %v634 = vsub.f32 %v15, %v633
  %v635 = vand.u32 %v634, 4294901760
  %636 = vmatmul.mubr.f32.gmra.mrb[0].mxu0 %v635
  %v637 = vpop.f32.mrb[0].mxu0
  %v638 = vadd.f32 %v530, %v637
  %v639 = vpop.f32.mrb[0].mxu0
  %640 = vdwg.mxu0
  %641 = vmatprep.subr.mxu0 0.0
  %v642 = vand.u32 %v17, 4294901760
  %v643 = vsub.f32 %v17, %v642
  %v644 = vand.u32 %v643, 4294901760
  %645 = vmatpush1.msra.mxu0 %v644
  %646 = vmatprep.subr.mxu0 0.0
  %v647 = vand.u32 %v18, 4294901760
  %v648 = vsub.f32 %v18, %v647
  %v649 = vand.u32 %v648, 4294901760
  %650 = vmatpush1.msra.mxu0 %v649
  %651 = vmatprep.subr.mxu0 0.0
  %v652 = vand.u32 %v19, 4294901760
  %v653 = vsub.f32 %v19, %v652
  %v654 = vand.u32 %v653, 4294901760
  %655 = vmatpush1.msra.mxu0 %v654
  %656 = vmatprep.subr.mxu0 0.0
  %v657 = vand.u32 %v20, 4294901760
  %v658 = vsub.f32 %v20, %v657
  %v659 = vand.u32 %v658, 4294901760
  %660 = vmatpush1.msra.mxu0 %v659
  %661 = vmatprep.subr.mxu0 0.0
  %v662 = vand.u32 %v21, 4294901760
  %v663 = vsub.f32 %v21, %v662
  %v664 = vand.u32 %v663, 4294901760
  %665 = vmatpush1.msra.mxu0 %v664
  %666 = vmatprep.subr.mxu0 0.0
  %v667 = vand.u32 %v22, 4294901760
  %v668 = vsub.f32 %v22, %v667
  %v669 = vand.u32 %v668, 4294901760
  %670 = vmatpush1.msra.mxu0 %v669
  %671 = vmatprep.subr.mxu0 0.0
  %v672 = vand.u32 %v23, 4294901760
  %v673 = vsub.f32 %v23, %v672
  %v674 = vand.u32 %v673, 4294901760
  %675 = vmatpush1.msra.mxu0 %v674
  %676 = vmatprep.subr.mxu0 0.0
  %v677 = vand.u32 %v24, 4294901760
  %v678 = vsub.f32 %v24, %v677
  %v679 = vand.u32 %v678, 4294901760
  %680 = vmatpush1.msra.mxu0 %v679
  %681 = vmatprep.subr.mxu0 0.0
  %v682 = vand.u32 %v25, 4294901760
  %v683 = vsub.f32 %v25, %v682
  %v684 = vand.u32 %v683, 4294901760
  %685 = vmatpush1.msra.mxu0 %v684
  %686 = vmatprep.subr.mxu0 0.0
  %v687 = vand.u32 %v26, 4294901760
  %v688 = vsub.f32 %v26, %v687
  %v689 = vand.u32 %v688, 4294901760
  %690 = vmatpush1.msra.mxu0 %v689
  %691 = vmatprep.subr.mxu0 0.0
  %v692 = vand.u32 %v27, 4294901760
  %v693 = vsub.f32 %v27, %v692
  %v694 = vand.u32 %v693, 4294901760
  %695 = vmatpush1.msra.mxu0 %v694
  %696 = vmatprep.subr.mxu0 0.0
  %v697 = vand.u32 %v28, 4294901760
  %v698 = vsub.f32 %v28, %v697
  %v699 = vand.u32 %v698, 4294901760
  %700 = vmatpush1.msra.mxu0 %v699
  %701 = vmatprep.subr.mxu0 0.0
  %v702 = vand.u32 %v29, 4294901760
  %v703 = vsub.f32 %v29, %v702
  %v704 = vand.u32 %v703, 4294901760
  %705 = vmatpush1.msra.mxu0 %v704
  %706 = vmatprep.subr.mxu0 0.0
  %v707 = vand.u32 %v30, 4294901760
  %v708 = vsub.f32 %v30, %v707
  %v709 = vand.u32 %v708, 4294901760
  %710 = vmatpush1.msra.mxu0 %v709
  %711 = vmatprep.subr.mxu0 0.0
  %v712 = vand.u32 %v31, 4294901760
  %v713 = vsub.f32 %v31, %v712
  %v714 = vand.u32 %v713, 4294901760
  %715 = vmatpush1.msra.mxu0 %v714
  %716 = vmatprep.subr.mxu0 0.0
  %v717 = vand.u32 %v32, 4294901760
  %v718 = vsub.f32 %v32, %v717
  %v719 = vand.u32 %v718, 4294901760
  %720 = vmatpush1.msra.mxu0 %v719
  %721 = vmatprep.subr.mxu0 0.0
  %v722 = vand.u32 %v33, 4294901760
  %v723 = vsub.f32 %v33, %v722
  %v724 = vand.u32 %v723, 4294901760
  %725 = vmatpush1.msra.mxu0 %v724
  %726 = vmatprep.subr.mxu0 0.0
  %v727 = vand.u32 %v34, 4294901760
  %v728 = vsub.f32 %v34, %v727
  %v729 = vand.u32 %v728, 4294901760
  %730 = vmatpush1.msra.mxu0 %v729
  %731 = vmatprep.subr.mxu0 0.0
  %v732 = vand.u32 %v35, 4294901760
  %v733 = vsub.f32 %v35, %v732
  %v734 = vand.u32 %v733, 4294901760
  %735 = vmatpush1.msra.mxu0 %v734
  %736 = vmatprep.subr.mxu0 0.0
  %v737 = vand.u32 %v36, 4294901760
  %v738 = vsub.f32 %v36, %v737
  %v739 = vand.u32 %v738, 4294901760
  %740 = vmatpush1.msra.mxu0 %v739
  %741 = vmatprep.subr.mxu0 0.0
  %v742 = vand.u32 %v37, 4294901760
  %v743 = vsub.f32 %v37, %v742
  %v744 = vand.u32 %v743, 4294901760
  %745 = vmatpush1.msra.mxu0 %v744
  %746 = vmatprep.subr.mxu0 0.0
  %v747 = vand.u32 %v38, 4294901760
  %v748 = vsub.f32 %v38, %v747
  %v749 = vand.u32 %v748, 4294901760
  %750 = vmatpush1.msra.mxu0 %v749
  %751 = vmatprep.subr.mxu0 0.0
  %v752 = vand.u32 %v39, 4294901760
  %v753 = vsub.f32 %v39, %v752
  %v754 = vand.u32 %v753, 4294901760
  %755 = vmatpush1.msra.mxu0 %v754
  %756 = vmatprep.subr.mxu0 0.0
  %v757 = vand.u32 %v40, 4294901760
  %v758 = vsub.f32 %v40, %v757
  %v759 = vand.u32 %v758, 4294901760
  %760 = vmatpush1.msra.mxu0 %v759
  %761 = vmatprep.subr.mxu0 0.0
  %v762 = vand.u32 %v41, 4294901760
  %v763 = vsub.f32 %v41, %v762
  %v764 = vand.u32 %v763, 4294901760
  %765 = vmatpush1.msra.mxu0 %v764
  %766 = vmatprep.subr.mxu0 0.0
  %v767 = vand.u32 %v42, 4294901760
  %v768 = vsub.f32 %v42, %v767
  %v769 = vand.u32 %v768, 4294901760
  %770 = vmatpush1.msra.mxu0 %v769
  %771 = vmatprep.subr.mxu0 0.0
  %v772 = vand.u32 %v43, 4294901760
  %v773 = vsub.f32 %v43, %v772
  %v774 = vand.u32 %v773, 4294901760
  %775 = vmatpush1.msra.mxu0 %v774
  %776 = vmatprep.subr.mxu0 0.0
  %v777 = vand.u32 %v44, 4294901760
  %v778 = vsub.f32 %v44, %v777
  %v779 = vand.u32 %v778, 4294901760
  %780 = vmatpush1.msra.mxu0 %v779
  %781 = vmatprep.subr.mxu0 0.0
  %v782 = vand.u32 %v45, 4294901760
  %v783 = vsub.f32 %v45, %v782
  %v784 = vand.u32 %v783, 4294901760
  %785 = vmatpush1.msra.mxu0 %v784
  %786 = vmatprep.subr.mxu0 0.0
  %v787 = vand.u32 %v46, 4294901760
  %v788 = vsub.f32 %v46, %v787
  %v789 = vand.u32 %v788, 4294901760
  %790 = vmatpush1.msra.mxu0 %v789
  %791 = vmatprep.subr.mxu0 0.0
  %v792 = vand.u32 %v47, 4294901760
  %v793 = vsub.f32 %v47, %v792
  %v794 = vand.u32 %v793, 4294901760
  %795 = vmatpush1.msra.mxu0 %v794
  %796 = vmatprep.subr.mxu0 0.0
  %v797 = vand.u32 %v48, 4294901760
  %v798 = vsub.f32 %v48, %v797
  %v799 = vand.u32 %v798, 4294901760
  %800 = vmatpush1.msra.mxu0 %v799
  %v801 = vand.u32 %v16, 4294901760
  %802 = vmatprep.mubr.f32.mxu0 %v801
  %v803 = vand.u32 %v15, 4294901760
  %804 = vmatmul.mubr.f32.gmra.mrb[0].mxu0 %v803
  %v805 = vpop.f32.mrb[0].mxu0
  %v806 = vadd.f32 %v638, %v805
  %v807 = vpop.f32.mrb[0].mxu0
  %808 = vdwg.mxu0
  %809 = vmatprep.subr.mxu0 0.0
  %v810 = vand.u32 %v17, 4294901760
  %811 = vmatpush1.msra.mxu0 %v810
  %812 = vmatprep.subr.mxu0 0.0
  %v813 = vand.u32 %v18, 4294901760
  %814 = vmatpush1.msra.mxu0 %v813
  %815 = vmatprep.subr.mxu0 0.0
  %v816 = vand.u32 %v19, 4294901760
  %817 = vmatpush1.msra.mxu0 %v816
  %818 = vmatprep.subr.mxu0 0.0
  %v819 = vand.u32 %v20, 4294901760
  %820 = vmatpush1.msra.mxu0 %v819
  %821 = vmatprep.subr.mxu0 0.0
  %v822 = vand.u32 %v21, 4294901760
  %823 = vmatpush1.msra.mxu0 %v822
  %824 = vmatprep.subr.mxu0 0.0
  %v825 = vand.u32 %v22, 4294901760
  %826 = vmatpush1.msra.mxu0 %v825
  %827 = vmatprep.subr.mxu0 0.0
  %v828 = vand.u32 %v23, 4294901760
  %829 = vmatpush1.msra.mxu0 %v828
  %830 = vmatprep.subr.mxu0 0.0
  %v831 = vand.u32 %v24, 4294901760
  %832 = vmatpush1.msra.mxu0 %v831
  %833 = vmatprep.subr.mxu0 0.0
  %v834 = vand.u32 %v25, 4294901760
  %835 = vmatpush1.msra.mxu0 %v834
  %836 = vmatprep.subr.mxu0 0.0
  %v837 = vand.u32 %v26, 4294901760
  %838 = vmatpush1.msra.mxu0 %v837
  %839 = vmatprep.subr.mxu0 0.0
  %v840 = vand.u32 %v27, 4294901760
  %841 = vmatpush1.msra.mxu0 %v840
  %842 = vmatprep.subr.mxu0 0.0
  %v843 = vand.u32 %v28, 4294901760
  %844 = vmatpush1.msra.mxu0 %v843
  %845 = vmatprep.subr.mxu0 0.0
  %v846 = vand.u32 %v29, 4294901760
  %847 = vmatpush1.msra.mxu0 %v846
  %848 = vmatprep.subr.mxu0 0.0
  %v849 = vand.u32 %v30, 4294901760
  %850 = vmatpush1.msra.mxu0 %v849
  %851 = vmatprep.subr.mxu0 0.0
  %v852 = vand.u32 %v31, 4294901760
  %853 = vmatpush1.msra.mxu0 %v852
  %854 = vmatprep.subr.mxu0 0.0
  %v855 = vand.u32 %v32, 4294901760
  %856 = vmatpush1.msra.mxu0 %v855
  %857 = vmatprep.subr.mxu0 0.0
  %v858 = vand.u32 %v33, 4294901760
  %859 = vmatpush1.msra.mxu0 %v858
  %860 = vmatprep.subr.mxu0 0.0
  %v861 = vand.u32 %v34, 4294901760
  %862 = vmatpush1.msra.mxu0 %v861
  %863 = vmatprep.subr.mxu0 0.0
  %v864 = vand.u32 %v35, 4294901760
  %865 = vmatpush1.msra.mxu0 %v864
  %866 = vmatprep.subr.mxu0 0.0
  %v867 = vand.u32 %v36, 4294901760
  %868 = vmatpush1.msra.mxu0 %v867
  %869 = vmatprep.subr.mxu0 0.0
  %v870 = vand.u32 %v37, 4294901760
  %871 = vmatpush1.msra.mxu0 %v870
  %872 = vmatprep.subr.mxu0 0.0
  %v873 = vand.u32 %v38, 4294901760
  %874 = vmatpush1.msra.mxu0 %v873
  %875 = vmatprep.subr.mxu0 0.0
  %v876 = vand.u32 %v39, 4294901760
  %877 = vmatpush1.msra.mxu0 %v876
  %878 = vmatprep.subr.mxu0 0.0
  %v879 = vand.u32 %v40, 4294901760
  %880 = vmatpush1.msra.mxu0 %v879
  %881 = vmatprep.subr.mxu0 0.0
  %v882 = vand.u32 %v41, 4294901760
  %883 = vmatpush1.msra.mxu0 %v882
  %884 = vmatprep.subr.mxu0 0.0
  %v885 = vand.u32 %v42, 4294901760
  %886 = vmatpush1.msra.mxu0 %v885
  %887 = vmatprep.subr.mxu0 0.0
  %v888 = vand.u32 %v43, 4294901760
  %889 = vmatpush1.msra.mxu0 %v888
  %890 = vmatprep.subr.mxu0 0.0
  %v891 = vand.u32 %v44, 4294901760
  %892 = vmatpush1.msra.mxu0 %v891
  %893 = vmatprep.subr.mxu0 0.0
  %v894 = vand.u32 %v45, 4294901760
  %895 = vmatpush1.msra.mxu0 %v894
  %896 = vmatprep.subr.mxu0 0.0
  %v897 = vand.u32 %v46, 4294901760
  %898 = vmatpush1.msra.mxu0 %v897
  %899 = vmatprep.subr.mxu0 0.0
  %v900 = vand.u32 %v47, 4294901760
  %901 = vmatpush1.msra.mxu0 %v900
  %902 = vmatprep.subr.mxu0 0.0
  %v903 = vand.u32 %v48, 4294901760
  %904 = vmatpush1.msra.mxu0 %v903
  %v905 = vand.u32 %v16, 4294901760
  %906 = vmatprep.mubr.f32.mxu0 %v905
  %v907 = vand.u32 %v15, 4294901760
  %908 = vmatmul.mubr.f32.gmra.mrb[0].mxu0 %v907
  %v909 = vpop.f32.mrb[0].mxu0
  %v910 = vadd.f32 %v806, %v909
  %v911 = vpop.f32.mrb[0].mxu0
  %912 = vdwg.mxu0
  %vm913 = vcmp.ge.f32.partialorder %v910, 0.0
  %v914 = vsub.f32 0.0, %v910
  %v915 = vsel %vm913, %v914, %v910
  %v916 = vmul.f32 %v915, 1.442695
  %v917 = vpow.pop %v916
  %v918 = vsel %vm913, 1.0, %v917
  %v919 = vadd.f32 %v917, 1.0
  %v920 = vrcp.pop %v919
  %v921 = vmul.f32 %v918, %v920
  %vm922 = vcmask 7168
  %923 = vst.msk [vmem:[%s3] sm:$0xff] %vm922, %v921
  // Predicated region
  $region14: #{tpu_custom_call.1} parent=0 // pred_check
    _
  $region15: #{tpu_custom_call.1} parent=0 // pred_check_branch
    %925 = sbr.rel (0) target = $region17
  $region16: #{tpu_custom_call.1} parent=0 // pred_region
    _
  $region17: #{tpu_custom_call.1} parent=0 // pred_fallthru
    _
  // Predicated region
  $region18: #{tpu_custom_call.1} parent=0 // pred_check
    _
  $region19: #{tpu_custom_call.1} parent=0 // pred_check_branch
    %927 = sbr.rel (0) target = $region21
  $region20: #{tpu_custom_call.1} parent=0 // pred_region
    _
  $region21: #{tpu_custom_call.1} parent=0 // pred_fallthru
    _

</llo_original>
